<compile_context>
chip_gen: v7x
topology: tpu7x:2x2x1
jax: 0.10.0
libtpu: 0.0.40
codegen_flags: <defaults>
</compile_context>

<pallas_src>
import functools

import jax
import jax.numpy as jnp
import numpy as np
from jax.experimental import pallas as pl
from jax.experimental.pallas import tpu as pltpu

_LANE = 128
_MAX_LANE_WIDTH = 1024          # cap on the lane (last) dim of the 3-D view


@functools.lru_cache(maxsize=1)
def _vmem_params():
    """Return (double-buffered block budget, scoped vmem limit) per chip gen."""
    cap = 0
    try:
        cap = int(pltpu.get_tpu_info().vmem_capacity_bytes)
    except Exception:
        cap = 0
    if cap >= 100 * 1024 * 1024:
        # v5e / v6e: 128 MiB physical VMEM -> large tiles, ~85% HBM roofline.
        return 44 * 1024 * 1024, 96 * 1024 * 1024
    # v7x (64 MiB physical) or unknown chip: stay conservative.
    return 20 * 1024 * 1024, 40 * 1024 * 1024


def _factor_segment(num_node, num_feature):
    """Factor one segment (num_node*num_feature elems) as rows x cols."""
    num_elems = num_node * num_feature
    if num_elems % _LANE != 0:
        # Natural factoring: last block dim == full feature dim (always legal),
        # rows stay tileable / pipelined.  Avoids the old whole-tensor block.
        return num_node, num_feature
    cols = _LANE
    while num_elems % (cols * 2) == 0 and cols * 2 <= _MAX_LANE_WIDTH:
        cols *= 2
    return num_elems // cols, cols


def _pick_block_rows(rows, per_row_bytes, sub, budget, block_rows=None):
    """Row-tile size: sublane-aligned, VMEM-budgeted, >=4 grid steps if possible."""
    if block_rows is None:
        block_rows = max(sub, budget // max(per_row_bytes, 1))
    # Keep at least ~4 grid steps so dimension_semantics=("parallel",) can
    # balance the copy across v7x's two TensorCores.
    target_steps = 4
    if rows > sub * target_steps:
        cap = ((rows + target_steps - 1) // target_steps + sub - 1) // sub * sub
        block_rows = min(block_rows, max(sub, cap))
    if rows <= block_rows:
        return rows                       # full dim -> always a legal block size
    return max(sub, (block_rows // sub) * sub)


def _fill_feats_kernel(x_ref, gen_ref, out_ref):
    """Copy one row-tile: out segment 0 <- x, segments 1.. <- gen (cast fused)."""
    out_ref[0, :, :] = x_ref[0, :, :].astype(out_ref.dtype)
    out_ref[1:, :, :] = gen_ref[:, :, :].astype(out_ref.dtype)


def _fill_feats_pallas(x, gen_feats, num_pred, block_rows=None):
    num_node, num_feature = x.shape
    out_dtype = jnp.promote_types(x.dtype, gen_feats.dtype)   # vstack-style promotion
    rows, cols = _factor_segment(num_node, num_feature)

    x_item = np.dtype(x.dtype).itemsize
    g_item = np.dtype(gen_feats.dtype).itemsize
    o_item = np.dtype(out_dtype).itemsize
    sub = max(8, 32 // min(x_item, g_item, o_item))   # sublane quantum
    budget, vmem_limit = _vmem_params()
    # Double-buffered bytes per row-of-blocks: x (1) + gen (P) + out (1+P) segments.
    per_row_bytes = 2 * (x_item + num_pred * g_item + (1 + num_pred) * o_item) * cols
    t_r = _pick_block_rows(rows, per_row_bytes, sub, budget, block_rows)

    x3 = x.reshape(1, rows, cols)               # free row-major reinterpretation
    gen3 = gen_feats.reshape(num_pred, rows, cols)   # gen.flatten() split in P chunks

    bytes_accessed = num_node * num_feature * (
        x_item + num_pred * g_item + (1 + num_pred) * o_item)

    out3 = pl.pallas_call(
        _fill_feats_kernel,
        out_shape=jax.ShapeDtypeStruct((1 + num_pred, rows, cols), out_dtype),
        grid=(pl.cdiv(rows, t_r),),
        in_specs=[
            pl.BlockSpec((1, t_r, cols), lambda r: (0, r, 0)),
            pl.BlockSpec((num_pred, t_r, cols), lambda r: (0, r, 0)),
        ],
        out_specs=pl.BlockSpec((1 + num_pred, t_r, cols), lambda r: (0, r, 0)),
        compiler_params=pltpu.CompilerParams(
            dimension_semantics=("parallel",),
            vmem_limit_bytes=vmem_limit,
        ),
        cost_estimate=pl.CostEstimate(
            flops=0, transcendentals=0, bytes_accessed=int(bytes_accessed)),
    )(x3, gen3)
    # out3 flat == concat(x.flat, gen.flat) == vstack(x, gen.reshape(-1, F)).flat
    return out3.reshape(num_node * (1 + num_pred), num_feature)


def mend_graph(x, edge_index, pred_missing, gen_feats, num_pred, block_rows=None):
    num_node, num_feature = x.shape

    # ---- fill_feats = vstack(x, gen_feats.view(-1, num_feature)) (Pallas) ----
    fill_feats = _fill_feats_pallas(x, gen_feats, num_pred, block_rows)

    # ---- mend edges: plain JAX integer bookkeeping ---------------------------
    # For node i, slot j:  (i, num_node + i*num_pred + j), valid iff
    #   j < min(num_pred, max(0, round(pred_missing[i])))
    deg = jnp.clip(jnp.round(pred_missing.reshape(-1)).astype(jnp.int32), 0, num_pred)
    flat = jnp.arange(num_node * num_pred, dtype=jnp.int32)
    node = flat // num_pred
    slot = flat % num_pred
    valid = slot < deg[node]

    # Cumsum compaction with a single fused scatter on the stacked (src,dst)
    # pairs: valid edges first (original (i, j) order kept), rest padded -1.
    pos = jnp.cumsum(valid.astype(jnp.int32)) - 1
    idx = jnp.where(valid, pos, num_node * num_pred)      # OOB index -> dropped
    edge_dtype = edge_index.dtype
    src_dst = jnp.stack([node, num_node + flat], axis=1).astype(edge_dtype)  # (N*P, 2)
    pad = jnp.full((num_node * num_pred, 2), -1, dtype=edge_dtype)
    new_edges = pad.at[idx].set(src_dst, mode="drop").T    # (2, N*P)

    # TODO(synk): the PyTorch reference returns a dynamically-sized edge list;
    # JAX needs static shapes, so fill_edges is padded to the maximum width
    # (invalid columns are -1) and the count of valid new edges is returned.
    fill_edges = jnp.concatenate([edge_index, new_edges], axis=1)
    num_new_edges = valid.sum()
    return fill_feats, fill_edges, num_new_edges


class MendGraphPallas:
    """JAX/Pallas equivalent of the PyTorch MendGraph module (no parameters)."""

    def __init__(self, num_pred):
        self.num_pred = num_pred

    def __call__(self, x, edge_index, pred_missing, gen_feats, block_rows=None):
        return mend_graph(x, edge_index, pred_missing, gen_feats,
                          self.num_pred, block_rows)


def _ref_new_edges(pred_missing, num_node, num_pred):
    deg_np = np.asarray(jnp.round(pred_missing)).astype(np.int32).reshape(-1)
    edges = []
    for i in range(num_node):
        for j in range(min(num_pred, max(0, int(deg_np[i])))):
            edges.append([i, num_node + i * num_pred + j])
    return np.asarray(edges, dtype=np.int32).reshape(-1, 2).T


def _check_case(key, num_node, num_feature, num_pred, num_edges,
                block_rows=None, x_dtype=jnp.float32, gen_dtype=jnp.float32):
    k1, k2, k3, k4 = jax.random.split(key, 4)
    x = jax.random.normal(k1, (num_node, num_feature), dtype=x_dtype)
    gen_feats = jax.random.normal(
        k2, (num_node, num_pred * num_feature), dtype=gen_dtype)
    pred_missing = jax.random.uniform(
        k3, (num_node,), minval=-1.0, maxval=float(num_pred + 2), dtype=jnp.float32)
    edge_index = jax.random.randint(
        k4, (2, num_edges), 0, num_node, dtype=jnp.int32)

    model = MendGraphPallas(num_pred)
    fill_feats, fill_edges, num_new = model(
        x, edge_index, pred_missing, gen_feats, block_rows=block_rows)
    jax.block_until_ready((fill_feats, fill_edges, num_new))

    out_dtype = jnp.promote_types(x_dtype, gen_dtype)
    assert fill_feats.shape == (num_node * (1 + num_pred), num_feature)
    assert fill_feats.dtype == out_dtype
    assert fill_edges.shape == (2, num_edges + num_node * num_pred)
    np.testing.assert_allclose(
        np.asarray(fill_feats[:num_node]), np.asarray(x.astype(out_dtype)))
    np.testing.assert_allclose(
        np.asarray(fill_feats[num_node:]),
        np.asarray(gen_feats.reshape(num_node * num_pred, num_feature)
                   .astype(out_dtype)))

    ref_edges = _ref_new_edges(pred_missing, num_node, num_pred)
    n_new = int(num_new)
    assert n_new == ref_edges.shape[1]
    got_new = np.asarray(fill_edges[:, num_edges:num_edges + n_new])
    np.testing.assert_array_equal(got_new, ref_edges)
    assert np.all(np.asarray(fill_edges[:, num_edges + n_new:]) == -1)
    np.testing.assert_array_equal(
        np.asarray(fill_edges[:, :num_edges]), np.asarray(edge_index))


if __name__ == "__main__":
    key = jax.random.PRNGKey(0)
    k_a, k_b, k_c = jax.random.split(key, 3)

    # Case 1: small shapes (matches the module's semantics check).
    _check_case(k_a, num_node=8, num_feature=32, num_pred=4, num_edges=12)

    # Case 2: larger shapes with a forced small row tile so the copy exercises
    # the multi-step, pipelined, "parallel" grid path.
    _check_case(k_b, num_node=256, num_feature=128, num_pred=3, num_edges=40,
                block_rows=8)

    # Case 3: non-multiple-of-128 segment (fallback factoring) + mixed dtypes,
    # exercising the in-kernel cast / vstack-style type promotion.
    _check_case(k_c, num_node=24, num_feature=20, num_pred=2, num_edges=10,
                x_dtype=jnp.bfloat16, gen_dtype=jnp.float32)

    print("KERNEL_OK")
</pallas_src>

<mosaic_0001>
module attributes {stable_mosaic.version = 11 : i64} {
  func.func @_fill_feats_kernel(%arg0: i32, %arg1: memref<1x1x256xf32, #tpu.memory_space<vmem>>, %arg2: memref<4x1x256xf32, #tpu.memory_space<vmem>>, %arg3: memref<5x1x256xf32, #tpu.memory_space<vmem>>) attributes {dimension_semantics = [#tpu.dimension_semantics<parallel>], iteration_bounds = array<i64: 1>, scalar_prefetch = 0 : i64, scratch_operands = 0 : i64, tpu.core_type = #tpu.core_type<tc>, window_params = [{transform_indices = @transform_0, window_bounds = array<i64: 1, 1, 256>}, {transform_indices = @transform_1, window_bounds = array<i64: 4, 1, 256>}, {transform_indices = @transform_2, window_bounds = array<i64: 5, 1, 256>}]} {
    %c0 = arith.constant 0 : index
    %c0_0 = arith.constant 0 : index
    %c0_1 = arith.constant 0 : index
    %0 = vector.load %arg1[%c0, %c0_0, %c0_1] : memref<1x1x256xf32, #tpu.memory_space<vmem>>, vector<1x1x256xf32>
    %1 = vector.shape_cast %0 : vector<1x1x256xf32> to vector<1x256xf32>
    %c0_2 = arith.constant 0 : index
    %c0_3 = arith.constant 0 : index
    %c0_4 = arith.constant 0 : index
    %2 = vector.load %arg3[%c0_2, %c0_3, %c0_4] : memref<5x1x256xf32, #tpu.memory_space<vmem>>, vector<1x1x256xf32>
    %3 = vector.shape_cast %2 : vector<1x1x256xf32> to vector<1x256xf32>
    %4 = vector.shape_cast %1 : vector<1x256xf32> to vector<1x1x256xf32>
    tpu.vector_store %arg3[%c0_2, %c0_3, %c0_4], %4 {strides = array<i32>} : memref<5x1x256xf32, #tpu.memory_space<vmem>>, vector<1x1x256xf32>,
    %c0_5 = arith.constant 0 : index
    %c0_6 = arith.constant 0 : index
    %c0_7 = arith.constant 0 : index
    %5 = vector.load %arg2[%c0_5, %c0_6, %c0_7] : memref<4x1x256xf32, #tpu.memory_space<vmem>>, vector<4x1x256xf32>
    %c1 = arith.constant 1 : index
    %c0_8 = arith.constant 0 : index
    %c0_9 = arith.constant 0 : index
    %6 = vector.load %arg3[%c1, %c0_8, %c0_9] : memref<5x1x256xf32, #tpu.memory_space<vmem>>, vector<4x1x256xf32>
    tpu.vector_store %arg3[%c1, %c0_8, %c0_9], %5 {strides = array<i32>} : memref<5x1x256xf32, #tpu.memory_space<vmem>>, vector<4x1x256xf32>,
    return
  }
  func.func @transform_0(%arg0: i32) -> (i32, i32, i32) {
    %c0_i32 = arith.constant 0 : i32
    %c0_i32_0 = arith.constant 0 : i32
    %c0_i32_1 = arith.constant 0 : i32
    return %c0_i32, %arg0, %c0_i32_0 : i32, i32, i32
  }
  func.func @transform_1(%arg0: i32) -> (i32, i32, i32) {
    %c0_i32 = arith.constant 0 : i32
    %c0_i32_0 = arith.constant 0 : i32
    %c0_i32_1 = arith.constant 0 : i32
    return %c0_i32, %arg0, %c0_i32_0 : i32, i32, i32
  }
  func.func @transform_2(%arg0: i32) -> (i32, i32, i32) {
    %c0_i32 = arith.constant 0 : i32
    %c0_i32_0 = arith.constant 0 : i32
    %c0_i32_1 = arith.constant 0 : i32
    return %c0_i32, %arg0, %c0_i32_0 : i32, i32, i32
  }
}

</mosaic_0001>

<llo_original>
// kernel: tpu_custom_call.1
$region0: #{tpu_custom_call.1}
  #allocation0 [shape = 'u32[]', space=smem, size = 0x4, offset = 0x4, fixed_abs, tag = 'smem constant byte address 0x4 - core index']
  #allocation1 [shape = 'u32[144,128]{1,0:T(1,128)}', space=vmem, size = 0x12000, scoped, tag = 'internal scratch']
  %s0 = inlined_call_operand.hbm [shape: f32[1,1,256], index: 0, kind: input, shape index: {}]
  %s1 = inlined_call_operand.hbm [shape: f32[4,1,256], index: 1, kind: input, shape index: {}]
  %s2 = inlined_call_operand.hbm [shape: f32[5,1,256], index: 2, kind: output, shape index: {}]
  %s3 = sld [smem:[#allocation0]]
  $region26: #{tpu_custom_call.1} parent=0
    _
  %s5 = ssub.s32 1, %s3
  %s6 = scalar_select 0, %s5, %s3
  $region1: #{tpu_custom_call.1} parent=0
    #allocation2 [shape = 'u8[1024]{0}', space=vmem, size = 0x400, scoped, tag = 'input window, operand 0, single buffered']
    #allocation3 [shape = 's32[1]{0}', space=sflag, size = 0x4, scoped, tag = 'scoped memory for tpu_custom_call.1']
    #allocation4 [shape = 's32[1]{0}', space=sflag, size = 0x4, scoped, tag = 'scoped memory for tpu_custom_call.1']
    #allocation5 [shape = 'u8[4096]{0}', space=vmem, size = 0x1000, scoped, tag = 'input window, operand 1, single buffered']
    #allocation6 [shape = 's32[1]{0}', space=sflag, size = 0x4, scoped, tag = 'scoped memory for tpu_custom_call.1']
    #allocation7 [shape = 'u8[5120]{0}', space=vmem, size = 0x1400, scoped, tag = 'output window, operand 0, single buffered']
    %7 = vsyncpa [#allocation3], 0
    %8 = vsyncpa [#allocation6], 0
    %9 = vsyncpa [#allocation4], 0
    // Predicated region
    $region2: #{tpu_custom_call.1} parent=1 // pred_check
      _
    $region3: #{tpu_custom_call.1} parent=1 // pred_check_branch
      %11 = sbr.rel (0) target = $region5
    $region4: #{tpu_custom_call.1} parent=1 // pred_region
      %s13 = ssub.s32 32, 32
      %14 = vsyncadd [#allocation3], %s13
      %s16 = sshll.u32 [#allocation2], 4
      %s17 = int_to_ptr.vmem [resolvable:$true] %s16
      %19 = dma.hbm_to_vmem [thread:$0]  %s0, 32, %s17, [#allocation3]
    $region5: #{tpu_custom_call.1} parent=1 // pred_fallthru
      _
    // Predicated region
    $region6: #{tpu_custom_call.1} parent=1 // pred_check
      _
    $region7: #{tpu_custom_call.1} parent=1 // pred_check_branch
      %21 = sbr.rel (0) target = $region9
    $region8: #{tpu_custom_call.1} parent=1 // pred_region
      %s23 = ssub.s32 128, 128
      %24 = vsyncadd [#allocation6], %s23
      %s25 = sshll.u32 [#allocation5], 4
      %s26 = int_to_ptr.vmem [resolvable:$true] %s25
      %31 = dma.hbm_to_vmem [thread:$0]  %s1, 128, %s26, [#allocation6], 32, 32, 2
    $region9: #{tpu_custom_call.1} parent=1 // pred_fallthru
      _
    // Predicated region
    $region10: #{tpu_custom_call.1} parent=1 // pred_check
      _
    $region11: #{tpu_custom_call.1} parent=1 // pred_check_branch
      %33 = sbr.rel (0) target = $region13
    $region12: #{tpu_custom_call.1} parent=1 // pred_region
      %34 = dma.done [#allocation3], 32
    $region13: #{tpu_custom_call.1} parent=1 // pred_fallthru
      _
    // Predicated region
    $region14: #{tpu_custom_call.1} parent=1 // pred_check
      _
    $region15: #{tpu_custom_call.1} parent=1 // pred_check_branch
      %36 = sbr.rel (0) target = $region17
    $region16: #{tpu_custom_call.1} parent=1 // pred_region
      %37 = dma.done [#allocation6], 128
    $region17: #{tpu_custom_call.1} parent=1 // pred_fallthru
      _
    %v38 = vld [vmem:[#allocation2] sm:$0x3]
    %v39 = vlaneseq
    %vm40 = vcmp.ge.s32.totalorder %v39, 0
    %vm41 = vcmp.lt.s32.totalorder %v39, 256
    %vm42 = vmand %vm40, %vm41
    %43 = vst.msk [vmem:[#allocation7] sm:$0x3] %vm42, %v38
    %v44 = vld [vmem:[#allocation5] sm:$0x3]
    %v45 = vld [vmem:[#allocation5 + $0x2] sm:$0x3]
    %v46 = vld [vmem:[#allocation5 + $0x4] sm:$0x3]
    %v47 = vld [vmem:[#allocation5 + $0x6] sm:$0x3]
    %s48 = scalar_lea.vmem [#allocation7], 2
    %49 = vst.msk [vmem:[%s48] sm:$0x3] %vm42, %v44
    %50 = vst.msk [vmem:[%s48 + $0x2] sm:$0x3] %vm42, %v45
    %51 = vst.msk [vmem:[%s48 + $0x4] sm:$0x3] %vm42, %v46
    %52 = vst.msk [vmem:[%s48 + $0x6] sm:$0x3] %vm42, %v47
    // Predicated region
    $region18: #{tpu_custom_call.1} parent=1 // pred_check
      _
    $region19: #{tpu_custom_call.1} parent=1 // pred_check_branch
      %54 = sbr.rel (0) target = $region21
    $region20: #{tpu_custom_call.1} parent=1 // pred_region
      %s56 = ssub.s32 160, 160
      %57 = vsyncadd [#allocation4], %s56
      %s58 = sshll.u32 [#allocation7], 4
      %s59 = int_to_ptr.vmem [resolvable:$true] %s58
      %64 = dma.vmem_to_hbm [thread:$0]  %s59, 160, %s2, [#allocation4], 32, 32, 2
    $region21: #{tpu_custom_call.1} parent=1 // pred_fallthru
      _
    // Predicated region
    $region22: #{tpu_custom_call.1} parent=1 // pred_check
      _
    $region23: #{tpu_custom_call.1} parent=1 // pred_check_branch
      %66 = sbr.rel (0) target = $region25
    $region24: #{tpu_custom_call.1} parent=1 // pred_region
      %67 = dma.done [#allocation4], 160
    $region25: #{tpu_custom_call.1} parent=1 // pred_fallthru
      _
    %68 = vsyncpa [#allocation3], 1
    %69 = vsyncpa [#allocation6], 1
    %70 = vsyncpa [#allocation4], 1

</llo_original>
